<compile_context>
chip_gen: v7x
topology: tpu7x:2x2x1
jax: 0.10.0
libtpu: 0.0.40
codegen_flags: <defaults>
</compile_context>

<pallas_src>
import functools

import jax
import jax.numpy as jnp
from jax.experimental import pallas as pl
from jax.experimental.pallas import tpu as pltpu


def _round_up(n, m):
    return ((n + m - 1) // m) * m


def _lstm_cell_kernel(lhs_ref, c_ref, w_ref, new_h_ref, new_c_ref):
    """One fused MXU pass + gate math for a (tile_b, tile_h) output block."""
    f32 = jnp.float32
    th = c_ref.shape[-1]           # tile_h
    th4 = 4 * th

    # [z | x | h | 1] @ block-diag weight ->
    #   [ weight_ih | weight_hh | 2*bias | x@W_ih + b_ih | h@W_hh + b_hh ]
    r = jnp.dot(lhs_ref[...], w_ref[...], preferred_element_type=f32)

    w_ih_z = r[:, 0 * th4:1 * th4]
    w_hh_z = r[:, 1 * th4:2 * th4]
    bias2  = r[:, 2 * th4:3 * th4]          # doubled bias (pre-folded in wrapper)
    xp     = r[:, 3 * th4:4 * th4]
    hp     = r[:, 4 * th4:5 * th4]

    # HadamardLinear(xp, w_ih_z, b) + HadamardLinear(hp, w_hh_z, b)
    ifgo = xp * w_ih_z + hp * w_hh_z + bias2

    i = ifgo[:, 0 * th:1 * th]              # NOTE: no sigmoid on i (matches reference)
    # sigmoid(x) == 0.5*tanh(0.5*x) + 0.5 : one EUP op instead of exp + divide.
    f = 0.5 * jnp.tanh(0.5 * ifgo[:, 1 * th:2 * th]) + 0.5
    g = jnp.tanh(ifgo[:, 2 * th:3 * th])
    o = 0.5 * jnp.tanh(0.5 * ifgo[:, 3 * th:4 * th]) + 0.5

    new_c = f * c_ref[...].astype(f32) + i * g
    new_h = o * jnp.tanh(new_c)

    new_h_ref[...] = new_h.astype(new_h_ref.dtype)
    new_c_ref[...] = new_c.astype(new_c_ref.dtype)


@functools.partial(
    jax.jit, static_argnames=("tile_b", "tile_h", "single_buffer_weights"))
def main_lstm_cell(z, x, h, c, params, *, tile_b=256, tile_h=None,
                   single_buffer_weights=True):
    """params: pre-transposed weights (in, out) and (1, 4H) biases."""
    B, H = h.shape
    z_dim = z.shape[-1]
    in_dim = x.shape[-1]
    H4 = 4 * H
    wdt = params["w_ih"].dtype

    # ---- hidden (gate) tiling: tile_h must divide H and be a lane multiple.
    if tile_h is None or tile_h >= H or H % tile_h != 0 or tile_h % 128 != 0:
        tile_h = H
    n_ht = H // tile_h

    # ---- batch tiling: ragged grid (no padding), >=2 tiles for v7x megacore.
    tile_b = min(tile_b, _round_up(B, 8))
    if B >= 16:
        tile_b = min(tile_b, _round_up(pl.cdiv(B, 2), 8))
    tile_b = max(8, _round_up(tile_b, 8))
    n_bt = pl.cdiv(B, tile_b)               # last block ragged; OOB writes dropped

    # ---- fused LHS: [z | x | h | ones | zero-pad to multiple of 8] ----------
    K1 = z_dim + in_dim + H + 1
    K1p = _round_up(K1, 8)
    lhs_parts = [z, x, h, jnp.ones((B, 1), z.dtype)]
    if K1p != K1:
        lhs_parts.append(jnp.zeros((B, K1p - K1), z.dtype))
    lhs = jnp.concatenate(lhs_parts, axis=-1)                     # (B, K1p)

    # ---- fused block-diagonal RHS (K1p, 20H) --------------------------------
    zero = lambda r, cc: jnp.zeros((r, cc), wdt)
    row_z = jnp.concatenate([params["wz_ih"], params["wz_hh"],
                             2.0 * params["wz_b"], zero(z_dim, 2 * H4)], -1)
    row_x = jnp.concatenate([zero(in_dim, 3 * H4), params["w_ih"],
                             zero(in_dim, H4)], -1)
    row_h = jnp.concatenate([zero(H, 4 * H4), params["w_hh"]], -1)
    row_1 = jnp.concatenate([zero(1, 3 * H4), params["b_ih"], params["b_hh"]], -1)
    rows = [row_z, row_x, row_h, row_1]
    if K1p != K1:
        rows.append(zero(K1p - K1, 5 * H4))
    w_fused = jnp.concatenate(rows, axis=0).astype(wdt)           # (K1p, 20H)

    # Rearrange columns so each hidden tile's [5 groups x 4 gates] are contiguous.
    w_fused = (w_fused.reshape(K1p, 5, 4, n_ht, tile_h)
                      .transpose(0, 3, 1, 2, 4)
                      .reshape(K1p, n_ht * 20 * tile_h))

    # ---- BlockSpecs ----------------------------------------------------------
    single_buf = single_buffer_weights and n_ht == 1   # keep 2 bufs if index varies
    w_kwargs = dict(pipeline_mode=pl.Buffered(1)) if single_buf else {}
    lhs_spec = pl.BlockSpec((tile_b, K1p), lambda b, j: (b, 0))
    c_spec = pl.BlockSpec((tile_b, tile_h), lambda b, j: (b, j))
    w_spec = pl.BlockSpec((K1p, 20 * tile_h), lambda b, j: (0, j), **w_kwargs)
    out_spec = pl.BlockSpec((tile_b, tile_h), lambda b, j: (b, j))

    # ---- VMEM limit: actual buffers * 2x headroom, capped below v7x physical.
    w_item = jnp.dtype(wdt).itemsize
    a_item = jnp.dtype(z.dtype).itemsize
    w_bytes = K1p * 20 * tile_h * w_item * (1 if single_buf else 2)
    act_bytes = 2 * tile_b * (K1p + tile_h) * a_item               # dbl-buffered inputs
    out_bytes = 2 * 2 * tile_b * tile_h * jnp.dtype(h.dtype).itemsize
    interm_bytes = tile_b * 30 * tile_h * 4                        # f32 r + gate temps
    vmem_limit = int(min(48 * 2**20,
                         max(2 * (w_bytes + act_bytes + out_bytes + interm_bytes),
                             8 * 2**20)))

    grid_spec = pltpu.PrefetchScalarGridSpec(
        num_scalar_prefetch=0,
        grid=(n_bt, n_ht),
        in_specs=[lhs_spec, c_spec, w_spec],
        out_specs=[out_spec, out_spec],
    )

    new_h, new_c = pl.pallas_call(
        _lstm_cell_kernel,
        out_shape=(jax.ShapeDtypeStruct((B, H), h.dtype),
                   jax.ShapeDtypeStruct((B, H), c.dtype)),
        grid_spec=grid_spec,
        compiler_params=pltpu.CompilerParams(
            dimension_semantics=("parallel", "parallel"),   # both axes independent
            vmem_limit_bytes=vmem_limit,
        ),
    )(lhs, c, w_fused)

    return new_h, new_c


def _ref_forward(z, x, h, c, params):
    """Pure-JAX reference mirroring the PyTorch forward exactly."""
    weight_ih = z @ params["wz_ih"]
    weight_hh = z @ params["wz_hh"]
    bias = z @ params["wz_b"]
    xp = x @ params["w_ih"] + params["b_ih"]
    hp = h @ params["w_hh"] + params["b_hh"]
    ifgo = (xp * weight_ih + bias) + (hp * weight_hh + bias)
    H = c.shape[-1]
    i, f, g, o = (ifgo[:, k * H:(k + 1) * H] for k in range(4))
    f = jax.nn.sigmoid(f)
    g = jnp.tanh(g)
    o = jax.nn.sigmoid(o)
    new_c = f * c + i * g
    new_h = o * jnp.tanh(new_c)
    return new_h, new_c


if __name__ == "__main__":
    B, input_dim, hidden_dim, z_dim = 2, 16, 32, 8
    H4 = 4 * hidden_dim

    key = jax.random.PRNGKey(0)
    ks = jax.random.split(key, 12)

    # Deterministic synthetic parameters (stored pre-transposed: (in, out)).
    params = {
        "wz_ih": 0.1 * jax.random.normal(ks[0], (z_dim, H4), jnp.float32),
        "wz_hh": 0.1 * jax.random.normal(ks[1], (z_dim, H4), jnp.float32),
        "wz_b":  0.1 * jax.random.normal(ks[2], (z_dim, H4), jnp.float32),
        "w_ih":  0.1 * jax.random.normal(ks[3], (input_dim, H4), jnp.float32),
        "b_ih":  0.1 * jax.random.normal(ks[4], (1, H4), jnp.float32),
        "w_hh":  0.1 * jax.random.normal(ks[5], (hidden_dim, H4), jnp.float32),
        "b_hh":  0.1 * jax.random.normal(ks[6], (1, H4), jnp.float32),
    }

    z = jax.random.normal(ks[7], (B, z_dim), jnp.float32)
    x = jax.random.normal(ks[8], (B, input_dim), jnp.float32)
    h = jax.random.normal(ks[9], (B, hidden_dim), jnp.float32)
    c = jax.random.normal(ks[10], (B, hidden_dim), jnp.float32)

    try:
        new_h, new_c = main_lstm_cell(z, x, h, c, params)
        jax.block_until_ready((new_h, new_c))
    except Exception:
        # Fallback if this JAX build rejects single-buffered weight BlockSpecs.
        new_h, new_c = main_lstm_cell(z, x, h, c, params,
                                      single_buffer_weights=False)
        jax.block_until_ready((new_h, new_c))

    ref_h, ref_c = _ref_forward(z, x, h, c, params)
    assert new_h.shape == ref_h.shape and new_c.shape == ref_c.shape
    assert jnp.allclose(new_h, ref_h, atol=1e-5, rtol=1e-5)
    assert jnp.allclose(new_c, ref_c, atol=1e-5, rtol=1e-5)

    print("KERNEL_OK")
</pallas_src>

<mosaic_0001>
module attributes {stable_mosaic.version = 11 : i64} {
  func.func @_lstm_cell_kernel(%arg0: i32, %arg1: i32, %arg2: memref<8x64xf32, #tpu.memory_space<vmem>>, %arg3: memref<8x32xf32, #tpu.memory_space<vmem>>, %arg4: memref<64x640xf32, #tpu.memory_space<vmem>>, %arg5: memref<8x32xf32, #tpu.memory_space<vmem>>, %arg6: memref<8x32xf32, #tpu.memory_space<vmem>>) attributes {dimension_semantics = [#tpu.dimension_semantics<parallel>, #tpu.dimension_semantics<parallel>], iteration_bounds = array<i64: 1, 1>, scalar_prefetch = 0 : i64, scratch_operands = 0 : i64, tpu.core_type = #tpu.core_type<tc>, window_params = [{transform_indices = @transform_0, window_bounds = array<i64: 8, 64>}, {transform_indices = @transform_1, window_bounds = array<i64: 8, 32>}, {pipeline_mode = #tpu.pipeline_mode<synchronous>, transform_indices = @transform_2, window_bounds = array<i64: 64, 640>}, {transform_indices = @transform_3, window_bounds = array<i64: 8, 32>}, {transform_indices = @transform_4, window_bounds = array<i64: 8, 32>}]} {
    %c0 = arith.constant 0 : index
    %c0_0 = arith.constant 0 : index
    %0 = vector.load %arg2[%c0, %c0_0] : memref<8x64xf32, #tpu.memory_space<vmem>>, vector<8x64xf32>
    %c0_1 = arith.constant 0 : index
    %c0_2 = arith.constant 0 : index
    %1 = vector.load %arg4[%c0_1, %c0_2] : memref<64x640xf32, #tpu.memory_space<vmem>>, vector<64x640xf32>
    %cst = arith.constant dense<0.000000e+00> : vector<8x640xf32>
    %2 = tpu.matmul %0, %1, %cst {dimension_numbers = #tpu.dot_dimension_numbers<[1], [0], [0], [1], [0, 0, 1, 1], [], []>} : vector<8x64xf32>, vector<64x640xf32>, vector<8x640xf32> -> vector<8x640xf32>
    %3 = vector.extract_strided_slice %2 {offsets = [0, 0], sizes = [8, 128], strides = [1, 1]} : vector<8x640xf32> to vector<8x128xf32>
    %4 = vector.extract_strided_slice %2 {offsets = [0, 128], sizes = [8, 128], strides = [1, 1]} : vector<8x640xf32> to vector<8x128xf32>
    %5 = vector.extract_strided_slice %2 {offsets = [0, 256], sizes = [8, 128], strides = [1, 1]} : vector<8x640xf32> to vector<8x128xf32>
    %6 = vector.extract_strided_slice %2 {offsets = [0, 384], sizes = [8, 128], strides = [1, 1]} : vector<8x640xf32> to vector<8x128xf32>
    %7 = vector.extract_strided_slice %2 {offsets = [0, 512], sizes = [8, 128], strides = [1, 1]} : vector<8x640xf32> to vector<8x128xf32>
    %8 = arith.mulf %6, %3 : vector<8x128xf32>
    %9 = arith.mulf %7, %4 : vector<8x128xf32>
    %10 = arith.addf %8, %9 : vector<8x128xf32>
    %11 = arith.addf %10, %5 : vector<8x128xf32>
    %12 = vector.extract_strided_slice %11 {offsets = [0, 0], sizes = [8, 32], strides = [1, 1]} : vector<8x128xf32> to vector<8x32xf32>
    %13 = vector.extract_strided_slice %11 {offsets = [0, 32], sizes = [8, 32], strides = [1, 1]} : vector<8x128xf32> to vector<8x32xf32>
    %cst_3 = arith.constant 5.000000e-01 : f32
    %14 = vector.broadcast %cst_3 : f32 to vector<8x32xf32>
    %15 = arith.mulf %14, %13 : vector<8x32xf32>
    %16 = math.tanh %15 : vector<8x32xf32>
    %cst_4 = arith.constant 5.000000e-01 : f32
    %17 = vector.broadcast %cst_4 : f32 to vector<8x32xf32>
    %18 = arith.mulf %17, %16 : vector<8x32xf32>
    %cst_5 = arith.constant 5.000000e-01 : f32
    %19 = vector.broadcast %cst_5 : f32 to vector<8x32xf32>
    %20 = arith.addf %18, %19 : vector<8x32xf32>
    %21 = vector.extract_strided_slice %11 {offsets = [0, 64], sizes = [8, 32], strides = [1, 1]} : vector<8x128xf32> to vector<8x32xf32>
    %22 = math.tanh %21 : vector<8x32xf32>
    %23 = vector.extract_strided_slice %11 {offsets = [0, 96], sizes = [8, 32], strides = [1, 1]} : vector<8x128xf32> to vector<8x32xf32>
    %cst_6 = arith.constant 5.000000e-01 : f32
    %24 = vector.broadcast %cst_6 : f32 to vector<8x32xf32>
    %25 = arith.mulf %24, %23 : vector<8x32xf32>
    %26 = math.tanh %25 : vector<8x32xf32>
    %cst_7 = arith.constant 5.000000e-01 : f32
    %27 = vector.broadcast %cst_7 : f32 to vector<8x32xf32>
    %28 = arith.mulf %27, %26 : vector<8x32xf32>
    %cst_8 = arith.constant 5.000000e-01 : f32
    %29 = vector.broadcast %cst_8 : f32 to vector<8x32xf32>
    %30 = arith.addf %28, %29 : vector<8x32xf32>
    %c0_9 = arith.constant 0 : index
    %c0_10 = arith.constant 0 : index
    %31 = vector.load %arg3[%c0_9, %c0_10] : memref<8x32xf32, #tpu.memory_space<vmem>>, vector<8x32xf32>
    %32 = arith.mulf %20, %31 : vector<8x32xf32>
    %33 = arith.mulf %12, %22 : vector<8x32xf32>
    %34 = arith.addf %32, %33 : vector<8x32xf32>
    %35 = math.tanh %34 : vector<8x32xf32>
    %36 = arith.mulf %30, %35 : vector<8x32xf32>
    %c0_11 = arith.constant 0 : index
    %c0_12 = arith.constant 0 : index
    %37 = vector.load %arg5[%c0_11, %c0_12] : memref<8x32xf32, #tpu.memory_space<vmem>>, vector<8x32xf32>
    tpu.vector_store %arg5[%c0_11, %c0_12], %36 {strides = array<i32>} : memref<8x32xf32, #tpu.memory_space<vmem>>, vector<8x32xf32>,
    %c0_13 = arith.constant 0 : index
    %c0_14 = arith.constant 0 : index
    %38 = vector.load %arg6[%c0_13, %c0_14] : memref<8x32xf32, #tpu.memory_space<vmem>>, vector<8x32xf32>
    tpu.vector_store %arg6[%c0_13, %c0_14], %34 {strides = array<i32>} : memref<8x32xf32, #tpu.memory_space<vmem>>, vector<8x32xf32>,
    return
  }
  func.func @transform_0(%arg0: i32, %arg1: i32) -> (i32, i32) {
    %c0_i32 = arith.constant 0 : i32
    %c0_i32_0 = arith.constant 0 : i32
    return %arg0, %c0_i32 : i32, i32
  }
  func.func @transform_1(%arg0: i32, %arg1: i32) -> (i32, i32) {
    %c0_i32 = arith.constant 0 : i32
    return %arg0, %arg1 : i32, i32
  }
  func.func @transform_2(%arg0: i32, %arg1: i32) -> (i32, i32) {
    %c0_i32 = arith.constant 0 : i32
    %c0_i32_0 = arith.constant 0 : i32
    return %c0_i32, %arg1 : i32, i32
  }
  func.func @transform_3(%arg0: i32, %arg1: i32) -> (i32, i32) {
    %c0_i32 = arith.constant 0 : i32
    return %arg0, %arg1 : i32, i32
  }
  func.func @transform_4(%arg0: i32, %arg1: i32) -> (i32, i32) {
    %c0_i32 = arith.constant 0 : i32
    return %arg0, %arg1 : i32, i32
  }
}

module attributes {stable_mosaic.version = 11 : i64} {
  func.func @_lstm_cell_kernel(%arg0: i32, %arg1: i32, %arg2: memref<8x64xf32, #tpu.memory_space<vmem>>, %arg3: memref<8x32xf32, #tpu.memory_space<vmem>>, %arg4: memref<64x640xf32, #tpu.memory_space<vmem>>, %arg5: memref<8x32xf32, #tpu.memory_space<vmem>>, %arg6: memref<8x32xf32, #tpu.memory_space<vmem>>) attributes {dimension_semantics = [#tpu.dimension_semantics<parallel>, #tpu.dimension_semantics<parallel>], iteration_bounds = array<i64: 1, 1>, scalar_prefetch = 0 : i64, scratch_operands = 0 : i64, tpu.core_type = #tpu.core_type<tc>, window_params = [{transform_indices = @transform_0, window_bounds = array<i64: 8, 64>}, {transform_indices = @transform_1, window_bounds = array<i64: 8, 32>}, {transform_indices = @transform_2, window_bounds = array<i64: 64, 640>}, {transform_indices = @transform_3, window_bounds = array<i64: 8, 32>}, {transform_indices = @transform_4, window_bounds = array<i64: 8, 32>}]} {
    %c0 = arith.constant 0 : index
    %c0_0 = arith.constant 0 : index
    %0 = vector.load %arg2[%c0, %c0_0] : memref<8x64xf32, #tpu.memory_space<vmem>>, vector<8x64xf32>
    %c0_1 = arith.constant 0 : index
    %c0_2 = arith.constant 0 : index
    %1 = vector.load %arg4[%c0_1, %c0_2] : memref<64x640xf32, #tpu.memory_space<vmem>>, vector<64x640xf32>
    %cst = arith.constant dense<0.000000e+00> : vector<8x640xf32>
    %2 = tpu.matmul %0, %1, %cst {dimension_numbers = #tpu.dot_dimension_numbers<[1], [0], [0], [1], [0, 0, 1, 1], [], []>} : vector<8x64xf32>, vector<64x640xf32>, vector<8x640xf32> -> vector<8x640xf32>
    %3 = vector.extract_strided_slice %2 {offsets = [0, 0], sizes = [8, 128], strides = [1, 1]} : vector<8x640xf32> to vector<8x128xf32>
    %4 = vector.extract_strided_slice %2 {offsets = [0, 128], sizes = [8, 128], strides = [1, 1]} : vector<8x640xf32> to vector<8x128xf32>
    %5 = vector.extract_strided_slice %2 {offsets = [0, 256], sizes = [8, 128], strides = [1, 1]} : vector<8x640xf32> to vector<8x128xf32>
    %6 = vector.extract_strided_slice %2 {offsets = [0, 384], sizes = [8, 128], strides = [1, 1]} : vector<8x640xf32> to vector<8x128xf32>
    %7 = vector.extract_strided_slice %2 {offsets = [0, 512], sizes = [8, 128], strides = [1, 1]} : vector<8x640xf32> to vector<8x128xf32>
    %8 = arith.mulf %6, %3 : vector<8x128xf32>
    %9 = arith.mulf %7, %4 : vector<8x128xf32>
    %10 = arith.addf %8, %9 : vector<8x128xf32>
    %11 = arith.addf %10, %5 : vector<8x128xf32>
    %12 = vector.extract_strided_slice %11 {offsets = [0, 0], sizes = [8, 32], strides = [1, 1]} : vector<8x128xf32> to vector<8x32xf32>
    %13 = vector.extract_strided_slice %11 {offsets = [0, 32], sizes = [8, 32], strides = [1, 1]} : vector<8x128xf32> to vector<8x32xf32>
    %cst_3 = arith.constant 5.000000e-01 : f32
    %14 = vector.broadcast %cst_3 : f32 to vector<8x32xf32>
    %15 = arith.mulf %14, %13 : vector<8x32xf32>
    %16 = math.tanh %15 : vector<8x32xf32>
    %cst_4 = arith.constant 5.000000e-01 : f32
    %17 = vector.broadcast %cst_4 : f32 to vector<8x32xf32>
    %18 = arith.mulf %17, %16 : vector<8x32xf32>
    %cst_5 = arith.constant 5.000000e-01 : f32
    %19 = vector.broadcast %cst_5 : f32 to vector<8x32xf32>
    %20 = arith.addf %18, %19 : vector<8x32xf32>
    %21 = vector.extract_strided_slice %11 {offsets = [0, 64], sizes = [8, 32], strides = [1, 1]} : vector<8x128xf32> to vector<8x32xf32>
    %22 = math.tanh %21 : vector<8x32xf32>
    %23 = vector.extract_strided_slice %11 {offsets = [0, 96], sizes = [8, 32], strides = [1, 1]} : vector<8x128xf32> to vector<8x32xf32>
    %cst_6 = arith.constant 5.000000e-01 : f32
    %24 = vector.broadcast %cst_6 : f32 to vector<8x32xf32>
    %25 = arith.mulf %24, %23 : vector<8x32xf32>
    %26 = math.tanh %25 : vector<8x32xf32>
    %cst_7 = arith.constant 5.000000e-01 : f32
    %27 = vector.broadcast %cst_7 : f32 to vector<8x32xf32>
    %28 = arith.mulf %27, %26 : vector<8x32xf32>
    %cst_8 = arith.constant 5.000000e-01 : f32
    %29 = vector.broadcast %cst_8 : f32 to vector<8x32xf32>
    %30 = arith.addf %28, %29 : vector<8x32xf32>
    %c0_9 = arith.constant 0 : index
    %c0_10 = arith.constant 0 : index
    %31 = vector.load %arg3[%c0_9, %c0_10] : memref<8x32xf32, #tpu.memory_space<vmem>>, vector<8x32xf32>
    %32 = arith.mulf %20, %31 : vector<8x32xf32>
    %33 = arith.mulf %12, %22 : vector<8x32xf32>
    %34 = arith.addf %32, %33 : vector<8x32xf32>
    %35 = math.tanh %34 : vector<8x32xf32>
    %36 = arith.mulf %30, %35 : vector<8x32xf32>
    %c0_11 = arith.constant 0 : index
    %c0_12 = arith.constant 0 : index
    %37 = vector.load %arg5[%c0_11, %c0_12] : memref<8x32xf32, #tpu.memory_space<vmem>>, vector<8x32xf32>
    tpu.vector_store %arg5[%c0_11, %c0_12], %36 {strides = array<i32>} : memref<8x32xf32, #tpu.memory_space<vmem>>, vector<8x32xf32>,
    %c0_13 = arith.constant 0 : index
    %c0_14 = arith.constant 0 : index
    %38 = vector.load %arg6[%c0_13, %c0_14] : memref<8x32xf32, #tpu.memory_space<vmem>>, vector<8x32xf32>
    tpu.vector_store %arg6[%c0_13, %c0_14], %34 {strides = array<i32>} : memref<8x32xf32, #tpu.memory_space<vmem>>, vector<8x32xf32>,
    return
  }
  func.func @transform_0(%arg0: i32, %arg1: i32) -> (i32, i32) {
    %c0_i32 = arith.constant 0 : i32
    %c0_i32_0 = arith.constant 0 : i32
    return %arg0, %c0_i32 : i32, i32
  }
  func.func @transform_1(%arg0: i32, %arg1: i32) -> (i32, i32) {
    %c0_i32 = arith.constant 0 : i32
    return %arg0, %arg1 : i32, i32
  }
  func.func @transform_2(%arg0: i32, %arg1: i32) -> (i32, i32) {
    %c0_i32 = arith.constant 0 : i32
    %c0_i32_0 = arith.constant 0 : i32
    return %c0_i32, %arg1 : i32, i32
  }
  func.func @transform_3(%arg0: i32, %arg1: i32) -> (i32, i32) {
    %c0_i32 = arith.constant 0 : i32
    return %arg0, %arg1 : i32, i32
  }
  func.func @transform_4(%arg0: i32, %arg1: i32) -> (i32, i32) {
    %c0_i32 = arith.constant 0 : i32
    return %arg0, %arg1 : i32, i32
  }
}

</mosaic_0001>

<llo_original>
// kernel: main_lstm_cell.1
$region0: #{main_lstm_cell.1}
  #allocation0 [shape = 'u32[]', space=smem, size = 0x4, offset = 0x4, fixed_abs, tag = 'smem constant byte address 0x4 - core index']
  #allocation1 [shape = 'u32[144,128]{1,0:T(1,128)}', space=vmem, size = 0x12000, scoped, tag = 'internal scratch']
  %s0 = inlined_call_operand.vmem [shape: f32[2,64], index: 0, kind: input, shape index: {}]
  %s1 = inlined_call_operand.vmem [shape: f32[2,32], index: 1, kind: input, shape index: {}]
  %s2 = inlined_call_operand.vmem [shape: f32[64,640], index: 2, kind: input, shape index: {}]
  %s3 = inlined_call_operand.hbm [shape: f32[2,32], index: 3, kind: output, shape index: {0}]
  %s4 = inlined_call_operand.hbm [shape: f32[2,32], index: 4, kind: output, shape index: {1}]
  %5 = xla_tuple %s3, %s4
  %s6 = sld [smem:[#allocation0]]
  $region30: #{main_lstm_cell.1} parent=0
    _
  %s8 = ssub.s32 1, %s6
  %s9 = scalar_select 0, %s8, %s6
  $region1: #{main_lstm_cell.1} parent=0
    #allocation2 [shape = 'u8[4096]{0}', space=vmem, size = 0x1000, scoped, tag = 'output window, operand 0, single buffered']
    #allocation3 [shape = 's32[1]{0}', space=sflag, size = 0x4, scoped, tag = 'scoped memory for main_lstm_cell.1']
    #allocation4 [shape = 'u8[4096]{0}', space=vmem, size = 0x1000, scoped, tag = 'output window, operand 1, single buffered']
    #allocation5 [shape = 's32[1]{0}', space=sflag, size = 0x4, scoped, tag = 'scoped memory for main_lstm_cell.1']
    %10 = vsyncpa [#allocation3], 0
    %11 = vsyncpa [#allocation5], 0
    // Predicated region
    $region2: #{main_lstm_cell.1} parent=1 // pred_check
      _
    $region3: #{main_lstm_cell.1} parent=1 // pred_check_branch
      %13 = sbr.rel (0) target = $region5
    $region4: #{main_lstm_cell.1} parent=1 // pred_region
      _
    $region5: #{main_lstm_cell.1} parent=1 // pred_fallthru
      _
    // Predicated region
    $region6: #{main_lstm_cell.1} parent=1 // pred_check
      _
    $region7: #{main_lstm_cell.1} parent=1 // pred_check_branch
      %15 = sbr.rel (0) target = $region9
    $region8: #{main_lstm_cell.1} parent=1 // pred_region
      _
    $region9: #{main_lstm_cell.1} parent=1 // pred_fallthru
      _
    // Predicated region
    $region10: #{main_lstm_cell.1} parent=1 // pred_check
      _
    $region11: #{main_lstm_cell.1} parent=1 // pred_check_branch
      %17 = sbr.rel (0) target = $region13
    $region12: #{main_lstm_cell.1} parent=1 // pred_region
      _
    $region13: #{main_lstm_cell.1} parent=1 // pred_fallthru
      _
    %v18 = vld [vmem:[%s0] sm:$0xff]
    %v19 = vld [vmem:[%s2] sm:$0xff]
    %v20 = vld [vmem:[%s2 + $0x8] sm:$0xff]
    %v21 = vld [vmem:[%s2 + $0x10] sm:$0xff]
    %v22 = vld [vmem:[%s2 + $0x18] sm:$0xff]
    %v23 = vld [vmem:[%s2 + $0x20] sm:$0xff]
    %v24 = vld [vmem:[%s2 + $0x28] sm:$0xff]
    %v25 = vld [vmem:[%s2 + $0x30] sm:$0xff]
    %v26 = vld [vmem:[%s2 + $0x38] sm:$0xff]
    %v27 = vld [vmem:[%s2 + $0x40] sm:$0xff]
    %v28 = vld [vmem:[%s2 + $0x48] sm:$0xff]
    %v29 = vld [vmem:[%s2 + $0x50] sm:$0xff]
    %v30 = vld [vmem:[%s2 + $0x58] sm:$0xff]
    %v31 = vld [vmem:[%s2 + $0x60] sm:$0xff]
    %v32 = vld [vmem:[%s2 + $0x68] sm:$0xff]
    %v33 = vld [vmem:[%s2 + $0x70] sm:$0xff]
    %v34 = vld [vmem:[%s2 + $0x78] sm:$0xff]
    %v35 = vld [vmem:[%s2 + $0x80] sm:$0xff]
    %v36 = vld [vmem:[%s2 + $0x88] sm:$0xff]
    %v37 = vld [vmem:[%s2 + $0x90] sm:$0xff]
    %v38 = vld [vmem:[%s2 + $0x98] sm:$0xff]
    %v39 = vld [vmem:[%s2 + $0xa0] sm:$0xff]
    %v40 = vld [vmem:[%s2 + $0xa8] sm:$0xff]
    %v41 = vld [vmem:[%s2 + $0xb0] sm:$0xff]
    %v42 = vld [vmem:[%s2 + $0xb8] sm:$0xff]
    %v43 = vld [vmem:[%s2 + $0xc0] sm:$0xff]
    %v44 = vld [vmem:[%s2 + $0xc8] sm:$0xff]
    %v45 = vld [vmem:[%s2 + $0xd0] sm:$0xff]
    %v46 = vld [vmem:[%s2 + $0xd8] sm:$0xff]
    %v47 = vld [vmem:[%s2 + $0xe0] sm:$0xff]
    %v48 = vld [vmem:[%s2 + $0xe8] sm:$0xff]
    %v49 = vld [vmem:[%s2 + $0xf0] sm:$0xff]
    %v50 = vld [vmem:[%s2 + $0xf8] sm:$0xff]
    %v51 = vld [vmem:[%s2 + $0x100] sm:$0xff]
    %v52 = vld [vmem:[%s2 + $0x108] sm:$0xff]
    %v53 = vld [vmem:[%s2 + $0x110] sm:$0xff]
    %v54 = vld [vmem:[%s2 + $0x118] sm:$0xff]
    %v55 = vld [vmem:[%s2 + $0x120] sm:$0xff]
    %v56 = vld [vmem:[%s2 + $0x128] sm:$0xff]
    %v57 = vld [vmem:[%s2 + $0x130] sm:$0xff]
    %v58 = vld [vmem:[%s2 + $0x138] sm:$0xff]
    %vm59 = vcmask 523264
    %v61 = vsel %vm59, %v18, 0
    %63 = vmatprep.subr.mxu0 %v20
    %64 = vmatpush1.msra.mxu0 %v19
    %65 = vmatprep.subr.mxu0 %v25
    %66 = vmatpush1.msra.mxu0 %v24
    %67 = vmatprep.subr.mxu0 %v30
    %68 = vmatpush1.msra.mxu0 %v29
    %69 = vmatprep.subr.mxu0 %v35
    %70 = vmatpush1.msra.mxu0 %v34
    %71 = vmatprep.subr.mxu0 %v40
    %72 = vmatpush1.msra.mxu0 %v39
    %73 = vmatprep.subr.mxu0 %v45
    %74 = vmatpush1.msra.mxu0 %v44
    %75 = vmatprep.subr.mxu0 %v50
    %76 = vmatpush1.msra.mxu0 %v49
    %77 = vmatprep.subr.mxu0 %v55
    %78 = vmatpush1.msra.mxu0 %v54
    %79 = vmatprep.subr.mxu0 0.0
    %80 = vmatpush1.msra.mxu0 0.0
    %81 = vmatprep.subr.mxu0 0.0
    %82 = vmatpush1.msra.mxu0 0.0
    %83 = vmatprep.subr.mxu0 0.0
    %84 = vmatpush1.msra.mxu0 0.0
    %85 = vmatprep.subr.mxu0 0.0
    %86 = vmatpush1.msra.mxu0 0.0
    %87 = vmatprep.subr.mxu0 0.0
    %88 = vmatpush1.msra.mxu0 0.0
    %89 = vmatprep.subr.mxu0 0.0
    %90 = vmatpush1.msra.mxu0 0.0
    %91 = vmatprep.subr.mxu0 0.0
    %92 = vmatpush1.msra.mxu0 0.0
    %93 = vmatprep.subr.mxu0 0.0
    %94 = vmatpush1.msra.mxu0 0.0
    %95 = vmatprep.subr.mxu0 0.0
    %96 = vmatpush1.msra.mxu0 0.0
    %97 = vmatprep.subr.mxu0 0.0
    %98 = vmatpush1.msra.mxu0 0.0
    %99 = vmatprep.subr.mxu0 0.0
    %100 = vmatpush1.msra.mxu0 0.0
    %101 = vmatprep.subr.mxu0 0.0
    %102 = vmatpush1.msra.mxu0 0.0
    %103 = vmatprep.subr.mxu0 0.0
    %104 = vmatpush1.msra.mxu0 0.0
    %105 = vmatprep.subr.mxu0 0.0
    %106 = vmatpush1.msra.mxu0 0.0
    %107 = vmatprep.subr.mxu0 0.0
    %108 = vmatpush1.msra.mxu0 0.0
    %109 = vmatprep.subr.mxu0 0.0
    %110 = vmatpush1.msra.mxu0 0.0
    %111 = vmatprep.subr.mxu0 0.0
    %112 = vmatpush1.msra.mxu0 0.0
    %113 = vmatprep.subr.mxu0 0.0
    %114 = vmatpush1.msra.mxu0 0.0
    %115 = vmatprep.subr.mxu0 0.0
    %116 = vmatpush1.msra.mxu0 0.0
    %117 = vmatprep.subr.mxu0 0.0
    %118 = vmatpush1.msra.mxu0 0.0
    %119 = vmatprep.subr.mxu0 0.0
    %120 = vmatpush1.msra.mxu0 0.0
    %121 = vmatprep.subr.mxu0 0.0
    %122 = vmatpush1.msra.mxu0 0.0
    %123 = vmatprep.subr.mxu0 0.0
    %124 = vmatpush1.msra.mxu0 0.0
    %125 = vmatprep.subr.mxu0 0.0
    %126 = vmatpush1.msra.mxu0 0.0
    %127 = vmatprep.mubr.f32.mxu0 0.0
    %128 = vmatmul.mubr.f32.gmra.mrb[0].mxu0 %v61
    %v129 = vpop.f32.mrb[0].mxu0
    %v130 = vadd.f32 0.0, %v129
    %v131 = vpop.f32.mrb[0].mxu0
    %v132 = vadd.f32 0.0, %v131
    %133 = vdwg.mxu0
    %134 = vmatprep.subr.mxu0 %v22
    %135 = vmatpush1.msra.mxu0 %v21
    %136 = vmatprep.subr.mxu0 %v27
    %137 = vmatpush1.msra.mxu0 %v26
    %138 = vmatprep.subr.mxu0 %v32
    %139 = vmatpush1.msra.mxu0 %v31
    %140 = vmatprep.subr.mxu0 %v37
    %141 = vmatpush1.msra.mxu0 %v36
    %142 = vmatprep.subr.mxu0 %v42
    %143 = vmatpush1.msra.mxu0 %v41
    %144 = vmatprep.subr.mxu0 %v47
    %145 = vmatpush1.msra.mxu0 %v46
    %146 = vmatprep.subr.mxu0 %v52
    %147 = vmatpush1.msra.mxu0 %v51
    %148 = vmatprep.subr.mxu0 %v57
    %149 = vmatpush1.msra.mxu0 %v56
    %150 = vmatprep.subr.mxu0 0.0
    %151 = vmatpush1.msra.mxu0 0.0
    %152 = vmatprep.subr.mxu0 0.0
    %153 = vmatpush1.msra.mxu0 0.0
    %154 = vmatprep.subr.mxu0 0.0
    %155 = vmatpush1.msra.mxu0 0.0
    %156 = vmatprep.subr.mxu0 0.0
    %157 = vmatpush1.msra.mxu0 0.0
    %158 = vmatprep.subr.mxu0 0.0
    %159 = vmatpush1.msra.mxu0 0.0
    %160 = vmatprep.subr.mxu0 0.0
    %161 = vmatpush1.msra.mxu0 0.0
    %162 = vmatprep.subr.mxu0 0.0
    %163 = vmatpush1.msra.mxu0 0.0
    %164 = vmatprep.subr.mxu0 0.0
    %165 = vmatpush1.msra.mxu0 0.0
    %166 = vmatprep.subr.mxu0 0.0
    %167 = vmatpush1.msra.mxu0 0.0
    %168 = vmatprep.subr.mxu0 0.0
    %169 = vmatpush1.msra.mxu0 0.0
    %170 = vmatprep.subr.mxu0 0.0
    %171 = vmatpush1.msra.mxu0 0.0
    %172 = vmatprep.subr.mxu0 0.0
    %173 = vmatpush1.msra.mxu0 0.0
    %174 = vmatprep.subr.mxu0 0.0
    %175 = vmatpush1.msra.mxu0 0.0
    %176 = vmatprep.subr.mxu0 0.0
    %177 = vmatpush1.msra.mxu0 0.0
    %178 = vmatprep.subr.mxu0 0.0
    %179 = vmatpush1.msra.mxu0 0.0
    %180 = vmatprep.subr.mxu0 0.0
    %181 = vmatpush1.msra.mxu0 0.0
    %182 = vmatprep.subr.mxu0 0.0
    %183 = vmatpush1.msra.mxu0 0.0
    %184 = vmatprep.subr.mxu0 0.0
    %185 = vmatpush1.msra.mxu0 0.0
    %186 = vmatprep.subr.mxu0 0.0
    %187 = vmatpush1.msra.mxu0 0.0
    %188 = vmatprep.subr.mxu0 0.0
    %189 = vmatpush1.msra.mxu0 0.0
    %190 = vmatprep.subr.mxu0 0.0
    %191 = vmatpush1.msra.mxu0 0.0
    %192 = vmatprep.subr.mxu0 0.0
    %193 = vmatpush1.msra.mxu0 0.0
    %194 = vmatprep.subr.mxu0 0.0
    %195 = vmatpush1.msra.mxu0 0.0
    %196 = vmatprep.subr.mxu0 0.0
    %197 = vmatpush1.msra.mxu0 0.0
    %198 = vmatprep.mubr.f32.mxu0 0.0
    %199 = vmatmul.mubr.f32.gmra.mrb[0].mxu0 %v61
    %v200 = vpop.f32.mrb[0].mxu0
    %v201 = vadd.f32 0.0, %v200
    %v202 = vpop.f32.mrb[0].mxu0
    %v203 = vadd.f32 0.0, %v202
    %204 = vdwg.mxu0
    %205 = vmatprep.subr.mxu0 0.0
    %206 = vmatpush1.msra.mxu0 %v23
    %207 = vmatprep.subr.mxu0 0.0
    %208 = vmatpush1.msra.mxu0 %v28
    %209 = vmatprep.subr.mxu0 0.0
    %210 = vmatpush1.msra.mxu0 %v33
    %211 = vmatprep.subr.mxu0 0.0
    %212 = vmatpush1.msra.mxu0 %v38
    %213 = vmatprep.subr.mxu0 0.0
    %214 = vmatpush1.msra.mxu0 %v43
    %215 = vmatprep.subr.mxu0 0.0
    %216 = vmatpush1.msra.mxu0 %v48
    %217 = vmatprep.subr.mxu0 0.0
    %218 = vmatpush1.msra.mxu0 %v53
    %219 = vmatprep.subr.mxu0 0.0
    %220 = vmatpush1.msra.mxu0 %v58
    %221 = vmatprep.subr.mxu0 0.0
    %222 = vmatpush1.msra.mxu0 0.0
    %223 = vmatprep.subr.mxu0 0.0
    %224 = vmatpush1.msra.mxu0 0.0
    %225 = vmatprep.subr.mxu0 0.0
    %226 = vmatpush1.msra.mxu0 0.0
    %227 = vmatprep.subr.mxu0 0.0
    %228 = vmatpush1.msra.mxu0 0.0
    %229 = vmatprep.subr.mxu0 0.0
    %230 = vmatpush1.msra.mxu0 0.0
    %231 = vmatprep.subr.mxu0 0.0
    %232 = vmatpush1.msra.mxu0 0.0
    %233 = vmatprep.subr.mxu0 0.0
    %234 = vmatpush1.msra.mxu0 0.0
    %235 = vmatprep.subr.mxu0 0.0
    %236 = vmatpush1.msra.mxu0 0.0
    %237 = vmatprep.subr.mxu0 0.0
    %238 = vmatpush1.msra.mxu0 0.0
    %239 = vmatprep.subr.mxu0 0.0
    %240 = vmatpush1.msra.mxu0 0.0
    %241 = vmatprep.subr.mxu0 0.0
    %242 = vmatpush1.msra.mxu0 0.0
    %243 = vmatprep.subr.mxu0 0.0
    %244 = vmatpush1.msra.mxu0 0.0
    %245 = vmatprep.subr.mxu0 0.0
    %246 = vmatpush1.msra.mxu0 0.0
    %247 = vmatprep.subr.mxu0 0.0
    %248 = vmatpush1.msra.mxu0 0.0
    %249 = vmatprep.subr.mxu0 0.0
    %250 = vmatpush1.msra.mxu0 0.0
    %251 = vmatprep.subr.mxu0 0.0
    %252 = vmatpush1.msra.mxu0 0.0
    %253 = vmatprep.subr.mxu0 0.0
    %254 = vmatpush1.msra.mxu0 0.0
    %255 = vmatprep.subr.mxu0 0.0
    %256 = vmatpush1.msra.mxu0 0.0
    %257 = vmatprep.subr.mxu0 0.0
    %258 = vmatpush1.msra.mxu0 0.0
    %259 = vmatprep.subr.mxu0 0.0
    %260 = vmatpush1.msra.mxu0 0.0
    %261 = vmatprep.subr.mxu0 0.0
    %262 = vmatpush1.msra.mxu0 0.0
    %263 = vmatprep.subr.mxu0 0.0
    %264 = vmatpush1.msra.mxu0 0.0
    %265 = vmatprep.subr.mxu0 0.0
    %266 = vmatpush1.msra.mxu0 0.0
    %267 = vmatprep.subr.mxu0 0.0
    %268 = vmatpush1.msra.mxu0 0.0
    %269 = vmatprep.mubr.f32.mxu0 0.0
    %270 = vmatmul.mubr.f32.gmra.mrb[0].mxu0 %v61
    %v271 = vpop.f32.mrb[0].mxu0
    %v272 = vadd.f32 0.0, %v271
    %v273 = vpop.f32.mrb[0].mxu0
    %274 = vdwg.mxu0
    %v275 = vmul.f32 %v203, %v130
    %v276 = vmul.f32 %v272, %v132
    %v277 = vadd.f32 %v275, %v276
    %v278 = vadd.f32 %v277, %v201
    %v279 = vmul.f32 %v278, 0.5
    %v280 = vtanh.pop %v279
    %v281 = vmul.f32 %v280, 0.5
    %v282 = vadd.f32 %v281, 0.5
    %v283 = vtanh.pop %v278
    %v284 = vld [vmem:[%s1] sm:$0xff]
    %286 = vrot.lane.b32.xlu0 %v284, 32
    %v287 = vpop.permute.xlu0 %286
    %v289 = vmul.f32 %v282, %v287
    %291 = vrot.lane.b32.xlu0 %v283, 64
    %v292 = vpop.permute.xlu0 %291
    %v294 = vmul.f32 %v278, %v292
    %296 = vrot.lane.b32.xlu0 %v294, 32
    %v297 = vpop.permute.xlu0 %296
    %v299 = vadd.f32 %v289, %v297
    %v300 = vtanh.pop %v299
    %302 = vrot.lane.b32.xlu0 %v300, 64
    %v303 = vpop.permute.xlu0 %302
    %v305 = vmul.f32 %v282, %v303
    %307 = vrot.lane.b32.xlu0 %v305, 32
    %v308 = vpop.permute.xlu0 %307
    %vm310 = vcmask 261120
    %311 = vst.msk [vmem:[#allocation2] sm:$0xff] %vm310, %v308
    %313 = vrot.lane.b32.xlu0 %v299, 96
    %v314 = vpop.permute.xlu0 %313
    %316 = vst.msk [vmem:[#allocation4] sm:$0xff] %vm310, %v314
    // Predicated region
    $region14: #{main_lstm_cell.1} parent=1 // pred_check
      _
    $region15: #{main_lstm_cell.1} parent=1 // pred_check_branch
      %318 = sbr.rel (0) target = $region17
    $region16: #{main_lstm_cell.1} parent=1 // pred_region
      %s320 = ssub.s32 128, 32
      %321 = vsyncadd [#allocation3], %s320
      %s322 = sshll.u32 [#allocation2], 4
      %s323 = int_to_ptr.vmem [resolvable:$true] %s322
      %328 = dma.vmem_to_hbm [thread:$0]  %s323, 32, %s3, [#allocation3], 32, 32, 2
    $region17: #{main_lstm_cell.1} parent=1 // pred_fallthru
      _
    // Predicated region
    $region18: #{main_lstm_cell.1} parent=1 // pred_check
      _
    $region19: #{main_lstm_cell.1} parent=1 // pred_check_branch
      %330 = sbr.rel (0) target = $region21
    $region20: #{main_lstm_cell.1} parent=1 // pred_region
      %s332 = ssub.s32 128, 32
      %333 = vsyncadd [#allocation5], %s332
      %s334 = sshll.u32 [#allocation4], 4
      %s335 = int_to_ptr.vmem [resolvable:$true] %s334
      %340 = dma.vmem_to_hbm [thread:$0]  %s335, 32, %s4, [#allocation5], 32, 32, 2
    $region21: #{main_lstm_cell.1} parent=1 // pred_fallthru
      _
    // Predicated region
    $region22: #{main_lstm_cell.1} parent=1 // pred_check
      _
    $region23: #{main_lstm_cell.1} parent=1 // pred_check_branch
      %342 = sbr.rel (0) target = $region25
    $region24: #{main_lstm_cell.1} parent=1 // pred_region
      %343 = dma.done [#allocation3], 128
    $region25: #{main_lstm_cell.1} parent=1 // pred_fallthru
      _
    // Predicated region
    $region26: #{main_lstm_cell.1} parent=1 // pred_check
      _
    $region27: #{main_lstm_cell.1} parent=1 // pred_check_branch
      %345 = sbr.rel (0) target = $region29
    $region28: #{main_lstm_cell.1} parent=1 // pred_region
      %346 = dma.done [#allocation5], 128
    $region29: #{main_lstm_cell.1} parent=1 // pred_fallthru
      _
    %347 = vsyncpa [#allocation3], 1
    %348 = vsyncpa [#allocation5], 1

// kernel: main_lstm_cell.1
$region0: #{main_lstm_cell.1}
  #allocation0 [shape = 'u32[]', space=smem, size = 0x4, offset = 0x4, fixed_abs, tag = 'smem constant byte address 0x4 - core index']
  #allocation1 [shape = 'u32[144,128]{1,0:T(1,128)}', space=vmem, size = 0x12000, scoped, tag = 'internal scratch']
  %s0 = inlined_call_operand.vmem [shape: f32[2,64], index: 0, kind: input, shape index: {}]
  %s1 = inlined_call_operand.vmem [shape: f32[2,32], index: 1, kind: input, shape index: {}]
  %s2 = inlined_call_operand.vmem [shape: f32[64,640], index: 2, kind: input, shape index: {}]
  %s3 = inlined_call_operand.hbm [shape: f32[2,32], index: 3, kind: output, shape index: {0}]
  %s4 = inlined_call_operand.hbm [shape: f32[2,32], index: 4, kind: output, shape index: {1}]
  %5 = xla_tuple %s3, %s4
  %s6 = sld [smem:[#allocation0]]
  $region30: #{main_lstm_cell.1} parent=0
    _
  %s8 = ssub.s32 1, %s6
  %s9 = scalar_select 0, %s8, %s6
  $region1: #{main_lstm_cell.1} parent=0
    #allocation2 [shape = 'u8[4096]{0}', space=vmem, size = 0x1000, scoped, tag = 'output window, operand 0, single buffered']
    #allocation3 [shape = 's32[1]{0}', space=sflag, size = 0x4, scoped, tag = 'scoped memory for main_lstm_cell.1']
    #allocation4 [shape = 'u8[4096]{0}', space=vmem, size = 0x1000, scoped, tag = 'output window, operand 1, single buffered']
    #allocation5 [shape = 's32[1]{0}', space=sflag, size = 0x4, scoped, tag = 'scoped memory for main_lstm_cell.1']
    %10 = vsyncpa [#allocation3], 0
    %11 = vsyncpa [#allocation5], 0
    // Predicated region
    $region2: #{main_lstm_cell.1} parent=1 // pred_check
      _
    $region3: #{main_lstm_cell.1} parent=1 // pred_check_branch
      %13 = sbr.rel (0) target = $region5
    $region4: #{main_lstm_cell.1} parent=1 // pred_region
      _
    $region5: #{main_lstm_cell.1} parent=1 // pred_fallthru
      _
    // Predicated region
    $region6: #{main_lstm_cell.1} parent=1 // pred_check
      _
    $region7: #{main_lstm_cell.1} parent=1 // pred_check_branch
      %15 = sbr.rel (0) target = $region9
    $region8: #{main_lstm_cell.1} parent=1 // pred_region
      _
    $region9: #{main_lstm_cell.1} parent=1 // pred_fallthru
      _
    // Predicated region
    $region10: #{main_lstm_cell.1} parent=1 // pred_check
      _
    $region11: #{main_lstm_cell.1} parent=1 // pred_check_branch
      %17 = sbr.rel (0) target = $region13
    $region12: #{main_lstm_cell.1} parent=1 // pred_region
      _
    $region13: #{main_lstm_cell.1} parent=1 // pred_fallthru
      _
    %v18 = vld [vmem:[%s0] sm:$0xff]
    %v19 = vld [vmem:[%s2] sm:$0xff]
    %v20 = vld [vmem:[%s2 + $0x8] sm:$0xff]
    %v21 = vld [vmem:[%s2 + $0x10] sm:$0xff]
    %v22 = vld [vmem:[%s2 + $0x18] sm:$0xff]
    %v23 = vld [vmem:[%s2 + $0x20] sm:$0xff]
    %v24 = vld [vmem:[%s2 + $0x28] sm:$0xff]
    %v25 = vld [vmem:[%s2 + $0x30] sm:$0xff]
    %v26 = vld [vmem:[%s2 + $0x38] sm:$0xff]
    %v27 = vld [vmem:[%s2 + $0x40] sm:$0xff]
    %v28 = vld [vmem:[%s2 + $0x48] sm:$0xff]
    %v29 = vld [vmem:[%s2 + $0x50] sm:$0xff]
    %v30 = vld [vmem:[%s2 + $0x58] sm:$0xff]
    %v31 = vld [vmem:[%s2 + $0x60] sm:$0xff]
    %v32 = vld [vmem:[%s2 + $0x68] sm:$0xff]
    %v33 = vld [vmem:[%s2 + $0x70] sm:$0xff]
    %v34 = vld [vmem:[%s2 + $0x78] sm:$0xff]
    %v35 = vld [vmem:[%s2 + $0x80] sm:$0xff]
    %v36 = vld [vmem:[%s2 + $0x88] sm:$0xff]
    %v37 = vld [vmem:[%s2 + $0x90] sm:$0xff]
    %v38 = vld [vmem:[%s2 + $0x98] sm:$0xff]
    %v39 = vld [vmem:[%s2 + $0xa0] sm:$0xff]
    %v40 = vld [vmem:[%s2 + $0xa8] sm:$0xff]
    %v41 = vld [vmem:[%s2 + $0xb0] sm:$0xff]
    %v42 = vld [vmem:[%s2 + $0xb8] sm:$0xff]
    %v43 = vld [vmem:[%s2 + $0xc0] sm:$0xff]
    %v44 = vld [vmem:[%s2 + $0xc8] sm:$0xff]
    %v45 = vld [vmem:[%s2 + $0xd0] sm:$0xff]
    %v46 = vld [vmem:[%s2 + $0xd8] sm:$0xff]
    %v47 = vld [vmem:[%s2 + $0xe0] sm:$0xff]
    %v48 = vld [vmem:[%s2 + $0xe8] sm:$0xff]
    %v49 = vld [vmem:[%s2 + $0xf0] sm:$0xff]
    %v50 = vld [vmem:[%s2 + $0xf8] sm:$0xff]
    %v51 = vld [vmem:[%s2 + $0x100] sm:$0xff]
    %v52 = vld [vmem:[%s2 + $0x108] sm:$0xff]
    %v53 = vld [vmem:[%s2 + $0x110] sm:$0xff]
    %v54 = vld [vmem:[%s2 + $0x118] sm:$0xff]
    %v55 = vld [vmem:[%s2 + $0x120] sm:$0xff]
    %v56 = vld [vmem:[%s2 + $0x128] sm:$0xff]
    %v57 = vld [vmem:[%s2 + $0x130] sm:$0xff]
    %v58 = vld [vmem:[%s2 + $0x138] sm:$0xff]
    %vm59 = vcmask 523264
    %v61 = vsel %vm59, %v18, 0
    %63 = vmatprep.subr.mxu0 %v20
    %64 = vmatpush1.msra.mxu0 %v19
    %65 = vmatprep.subr.mxu0 %v25
    %66 = vmatpush1.msra.mxu0 %v24
    %67 = vmatprep.subr.mxu0 %v30
    %68 = vmatpush1.msra.mxu0 %v29
    %69 = vmatprep.subr.mxu0 %v35
    %70 = vmatpush1.msra.mxu0 %v34
    %71 = vmatprep.subr.mxu0 %v40
    %72 = vmatpush1.msra.mxu0 %v39
    %73 = vmatprep.subr.mxu0 %v45
    %74 = vmatpush1.msra.mxu0 %v44
    %75 = vmatprep.subr.mxu0 %v50
    %76 = vmatpush1.msra.mxu0 %v49
    %77 = vmatprep.subr.mxu0 %v55
    %78 = vmatpush1.msra.mxu0 %v54
    %79 = vmatprep.subr.mxu0 0.0
    %80 = vmatpush1.msra.mxu0 0.0
    %81 = vmatprep.subr.mxu0 0.0
    %82 = vmatpush1.msra.mxu0 0.0
    %83 = vmatprep.subr.mxu0 0.0
    %84 = vmatpush1.msra.mxu0 0.0
    %85 = vmatprep.subr.mxu0 0.0
    %86 = vmatpush1.msra.mxu0 0.0
    %87 = vmatprep.subr.mxu0 0.0
    %88 = vmatpush1.msra.mxu0 0.0
    %89 = vmatprep.subr.mxu0 0.0
    %90 = vmatpush1.msra.mxu0 0.0
    %91 = vmatprep.subr.mxu0 0.0
    %92 = vmatpush1.msra.mxu0 0.0
    %93 = vmatprep.subr.mxu0 0.0
    %94 = vmatpush1.msra.mxu0 0.0
    %95 = vmatprep.subr.mxu0 0.0
    %96 = vmatpush1.msra.mxu0 0.0
    %97 = vmatprep.subr.mxu0 0.0
    %98 = vmatpush1.msra.mxu0 0.0
    %99 = vmatprep.subr.mxu0 0.0
    %100 = vmatpush1.msra.mxu0 0.0
    %101 = vmatprep.subr.mxu0 0.0
    %102 = vmatpush1.msra.mxu0 0.0
    %103 = vmatprep.subr.mxu0 0.0
    %104 = vmatpush1.msra.mxu0 0.0
    %105 = vmatprep.subr.mxu0 0.0
    %106 = vmatpush1.msra.mxu0 0.0
    %107 = vmatprep.subr.mxu0 0.0
    %108 = vmatpush1.msra.mxu0 0.0
    %109 = vmatprep.subr.mxu0 0.0
    %110 = vmatpush1.msra.mxu0 0.0
    %111 = vmatprep.subr.mxu0 0.0
    %112 = vmatpush1.msra.mxu0 0.0
    %113 = vmatprep.subr.mxu0 0.0
    %114 = vmatpush1.msra.mxu0 0.0
    %115 = vmatprep.subr.mxu0 0.0
    %116 = vmatpush1.msra.mxu0 0.0
    %117 = vmatprep.subr.mxu0 0.0
    %118 = vmatpush1.msra.mxu0 0.0
    %119 = vmatprep.subr.mxu0 0.0
    %120 = vmatpush1.msra.mxu0 0.0
    %121 = vmatprep.subr.mxu0 0.0
    %122 = vmatpush1.msra.mxu0 0.0
    %123 = vmatprep.subr.mxu0 0.0
    %124 = vmatpush1.msra.mxu0 0.0
    %125 = vmatprep.subr.mxu0 0.0
    %126 = vmatpush1.msra.mxu0 0.0
    %127 = vmatprep.mubr.f32.mxu0 0.0
    %128 = vmatmul.mubr.f32.gmra.mrb[0].mxu0 %v61
    %v129 = vpop.f32.mrb[0].mxu0
    %v130 = vadd.f32 0.0, %v129
    %v131 = vpop.f32.mrb[0].mxu0
    %v132 = vadd.f32 0.0, %v131
    %133 = vdwg.mxu0
    %134 = vmatprep.subr.mxu0 %v22
    %135 = vmatpush1.msra.mxu0 %v21
    %136 = vmatprep.subr.mxu0 %v27
    %137 = vmatpush1.msra.mxu0 %v26
    %138 = vmatprep.subr.mxu0 %v32
    %139 = vmatpush1.msra.mxu0 %v31
    %140 = vmatprep.subr.mxu0 %v37
    %141 = vmatpush1.msra.mxu0 %v36
    %142 = vmatprep.subr.mxu0 %v42
    %143 = vmatpush1.msra.mxu0 %v41
    %144 = vmatprep.subr.mxu0 %v47
    %145 = vmatpush1.msra.mxu0 %v46
    %146 = vmatprep.subr.mxu0 %v52
    %147 = vmatpush1.msra.mxu0 %v51
    %148 = vmatprep.subr.mxu0 %v57
    %149 = vmatpush1.msra.mxu0 %v56
    %150 = vmatprep.subr.mxu0 0.0
    %151 = vmatpush1.msra.mxu0 0.0
    %152 = vmatprep.subr.mxu0 0.0
    %153 = vmatpush1.msra.mxu0 0.0
    %154 = vmatprep.subr.mxu0 0.0
    %155 = vmatpush1.msra.mxu0 0.0
    %156 = vmatprep.subr.mxu0 0.0
    %157 = vmatpush1.msra.mxu0 0.0
    %158 = vmatprep.subr.mxu0 0.0
    %159 = vmatpush1.msra.mxu0 0.0
    %160 = vmatprep.subr.mxu0 0.0
    %161 = vmatpush1.msra.mxu0 0.0
    %162 = vmatprep.subr.mxu0 0.0
    %163 = vmatpush1.msra.mxu0 0.0
    %164 = vmatprep.subr.mxu0 0.0
    %165 = vmatpush1.msra.mxu0 0.0
    %166 = vmatprep.subr.mxu0 0.0
    %167 = vmatpush1.msra.mxu0 0.0
    %168 = vmatprep.subr.mxu0 0.0
    %169 = vmatpush1.msra.mxu0 0.0
    %170 = vmatprep.subr.mxu0 0.0
    %171 = vmatpush1.msra.mxu0 0.0
    %172 = vmatprep.subr.mxu0 0.0
    %173 = vmatpush1.msra.mxu0 0.0
    %174 = vmatprep.subr.mxu0 0.0
    %175 = vmatpush1.msra.mxu0 0.0
    %176 = vmatprep.subr.mxu0 0.0
    %177 = vmatpush1.msra.mxu0 0.0
    %178 = vmatprep.subr.mxu0 0.0
    %179 = vmatpush1.msra.mxu0 0.0
    %180 = vmatprep.subr.mxu0 0.0
    %181 = vmatpush1.msra.mxu0 0.0
    %182 = vmatprep.subr.mxu0 0.0
    %183 = vmatpush1.msra.mxu0 0.0
    %184 = vmatprep.subr.mxu0 0.0
    %185 = vmatpush1.msra.mxu0 0.0
    %186 = vmatprep.subr.mxu0 0.0
    %187 = vmatpush1.msra.mxu0 0.0
    %188 = vmatprep.subr.mxu0 0.0
    %189 = vmatpush1.msra.mxu0 0.0
    %190 = vmatprep.subr.mxu0 0.0
    %191 = vmatpush1.msra.mxu0 0.0
    %192 = vmatprep.subr.mxu0 0.0
    %193 = vmatpush1.msra.mxu0 0.0
    %194 = vmatprep.subr.mxu0 0.0
    %195 = vmatpush1.msra.mxu0 0.0
    %196 = vmatprep.subr.mxu0 0.0
    %197 = vmatpush1.msra.mxu0 0.0
    %198 = vmatprep.mubr.f32.mxu0 0.0
    %199 = vmatmul.mubr.f32.gmra.mrb[0].mxu0 %v61
    %v200 = vpop.f32.mrb[0].mxu0
    %v201 = vadd.f32 0.0, %v200
    %v202 = vpop.f32.mrb[0].mxu0
    %v203 = vadd.f32 0.0, %v202
    %204 = vdwg.mxu0
    %205 = vmatprep.subr.mxu0 0.0
    %206 = vmatpush1.msra.mxu0 %v23
    %207 = vmatprep.subr.mxu0 0.0
    %208 = vmatpush1.msra.mxu0 %v28
    %209 = vmatprep.subr.mxu0 0.0
    %210 = vmatpush1.msra.mxu0 %v33
    %211 = vmatprep.subr.mxu0 0.0
    %212 = vmatpush1.msra.mxu0 %v38
    %213 = vmatprep.subr.mxu0 0.0
    %214 = vmatpush1.msra.mxu0 %v43
    %215 = vmatprep.subr.mxu0 0.0
    %216 = vmatpush1.msra.mxu0 %v48
    %217 = vmatprep.subr.mxu0 0.0
    %218 = vmatpush1.msra.mxu0 %v53
    %219 = vmatprep.subr.mxu0 0.0
    %220 = vmatpush1.msra.mxu0 %v58
    %221 = vmatprep.subr.mxu0 0.0
    %222 = vmatpush1.msra.mxu0 0.0
    %223 = vmatprep.subr.mxu0 0.0
    %224 = vmatpush1.msra.mxu0 0.0
    %225 = vmatprep.subr.mxu0 0.0
    %226 = vmatpush1.msra.mxu0 0.0
    %227 = vmatprep.subr.mxu0 0.0
    %228 = vmatpush1.msra.mxu0 0.0
    %229 = vmatprep.subr.mxu0 0.0
    %230 = vmatpush1.msra.mxu0 0.0
    %231 = vmatprep.subr.mxu0 0.0
    %232 = vmatpush1.msra.mxu0 0.0
    %233 = vmatprep.subr.mxu0 0.0
    %234 = vmatpush1.msra.mxu0 0.0
    %235 = vmatprep.subr.mxu0 0.0
    %236 = vmatpush1.msra.mxu0 0.0
    %237 = vmatprep.subr.mxu0 0.0
    %238 = vmatpush1.msra.mxu0 0.0
    %239 = vmatprep.subr.mxu0 0.0
    %240 = vmatpush1.msra.mxu0 0.0
    %241 = vmatprep.subr.mxu0 0.0
    %242 = vmatpush1.msra.mxu0 0.0
    %243 = vmatprep.subr.mxu0 0.0
    %244 = vmatpush1.msra.mxu0 0.0
    %245 = vmatprep.subr.mxu0 0.0
    %246 = vmatpush1.msra.mxu0 0.0
    %247 = vmatprep.subr.mxu0 0.0
    %248 = vmatpush1.msra.mxu0 0.0
    %249 = vmatprep.subr.mxu0 0.0
    %250 = vmatpush1.msra.mxu0 0.0
    %251 = vmatprep.subr.mxu0 0.0
    %252 = vmatpush1.msra.mxu0 0.0
    %253 = vmatprep.subr.mxu0 0.0
    %254 = vmatpush1.msra.mxu0 0.0
    %255 = vmatprep.subr.mxu0 0.0
    %256 = vmatpush1.msra.mxu0 0.0
    %257 = vmatprep.subr.mxu0 0.0
    %258 = vmatpush1.msra.mxu0 0.0
    %259 = vmatprep.subr.mxu0 0.0
    %260 = vmatpush1.msra.mxu0 0.0
    %261 = vmatprep.subr.mxu0 0.0
    %262 = vmatpush1.msra.mxu0 0.0
    %263 = vmatprep.subr.mxu0 0.0
    %264 = vmatpush1.msra.mxu0 0.0
    %265 = vmatprep.subr.mxu0 0.0
    %266 = vmatpush1.msra.mxu0 0.0
    %267 = vmatprep.subr.mxu0 0.0
    %268 = vmatpush1.msra.mxu0 0.0
    %269 = vmatprep.mubr.f32.mxu0 0.0
    %270 = vmatmul.mubr.f32.gmra.mrb[0].mxu0 %v61
    %v271 = vpop.f32.mrb[0].mxu0
    %v272 = vadd.f32 0.0, %v271
    %v273 = vpop.f32.mrb[0].mxu0
    %274 = vdwg.mxu0
    %v275 = vmul.f32 %v203, %v130
    %v276 = vmul.f32 %v272, %v132
    %v277 = vadd.f32 %v275, %v276
    %v278 = vadd.f32 %v277, %v201
    %v279 = vmul.f32 %v278, 0.5
    %v280 = vtanh.pop %v279
    %v281 = vmul.f32 %v280, 0.5
    %v282 = vadd.f32 %v281, 0.5
    %v283 = vtanh.pop %v278
    %v284 = vld [vmem:[%s1] sm:$0xff]
    %286 = vrot.lane.b32.xlu0 %v284, 32
    %v287 = vpop.permute.xlu0 %286
    %v289 = vmul.f32 %v282, %v287
    %291 = vrot.lane.b32.xlu0 %v283, 64
    %v292 = vpop.permute.xlu0 %291
    %v294 = vmul.f32 %v278, %v292
    %296 = vrot.lane.b32.xlu0 %v294, 32
    %v297 = vpop.permute.xlu0 %296
    %v299 = vadd.f32 %v289, %v297
    %v300 = vtanh.pop %v299
    %302 = vrot.lane.b32.xlu0 %v300, 64
    %v303 = vpop.permute.xlu0 %302
    %v305 = vmul.f32 %v282, %v303
    %307 = vrot.lane.b32.xlu0 %v305, 32
    %v308 = vpop.permute.xlu0 %307
    %vm310 = vcmask 261120
    %311 = vst.msk [vmem:[#allocation2] sm:$0xff] %vm310, %v308
    %313 = vrot.lane.b32.xlu0 %v299, 96
    %v314 = vpop.permute.xlu0 %313
    %316 = vst.msk [vmem:[#allocation4] sm:$0xff] %vm310, %v314
    // Predicated region
    $region14: #{main_lstm_cell.1} parent=1 // pred_check
      _
    $region15: #{main_lstm_cell.1} parent=1 // pred_check_branch
      %318 = sbr.rel (0) target = $region17
    $region16: #{main_lstm_cell.1} parent=1 // pred_region
      %s320 = ssub.s32 128, 32
      %321 = vsyncadd [#allocation3], %s320
      %s322 = sshll.u32 [#allocation2], 4
      %s323 = int_to_ptr.vmem [resolvable:$true] %s322
      %328 = dma.vmem_to_hbm [thread:$0]  %s323, 32, %s3, [#allocation3], 32, 32, 2
    $region17: #{main_lstm_cell.1} parent=1 // pred_fallthru
      _
    // Predicated region
    $region18: #{main_lstm_cell.1} parent=1 // pred_check
      _
    $region19: #{main_lstm_cell.1} parent=1 // pred_check_branch
      %330 = sbr.rel (0) target = $region21
    $region20: #{main_lstm_cell.1} parent=1 // pred_region
      %s332 = ssub.s32 128, 32
      %333 = vsyncadd [#allocation5], %s332
      %s334 = sshll.u32 [#allocation4], 4
      %s335 = int_to_ptr.vmem [resolvable:$true] %s334
      %340 = dma.vmem_to_hbm [thread:$0]  %s335, 32, %s4, [#allocation5], 32, 32, 2
    $region21: #{main_lstm_cell.1} parent=1 // pred_fallthru
      _
    // Predicated region
    $region22: #{main_lstm_cell.1} parent=1 // pred_check
      _
    $region23: #{main_lstm_cell.1} parent=1 // pred_check_branch
      %342 = sbr.rel (0) target = $region25
    $region24: #{main_lstm_cell.1} parent=1 // pred_region
      %343 = dma.done [#allocation3], 128
    $region25: #{main_lstm_cell.1} parent=1 // pred_fallthru
      _
    // Predicated region
    $region26: #{main_lstm_cell.1} parent=1 // pred_check
      _
    $region27: #{main_lstm_cell.1} parent=1 // pred_check_branch
      %345 = sbr.rel (0) target = $region29
    $region28: #{main_lstm_cell.1} parent=1 // pred_region
      %346 = dma.done [#allocation5], 128
    $region29: #{main_lstm_cell.1} parent=1 // pred_fallthru
      _
    %347 = vsyncpa [#allocation3], 1
    %348 = vsyncpa [#allocation5], 1

</llo_original>
